<compile_context>
chip_gen: v6e
topology: v6e:2x2x1
jax: 0.10.0
libtpu: 0.0.40
codegen_flags: <defaults>
</compile_context>

<pallas_src>
import jax
import jax.numpy as jnp
from jax.experimental import pallas as pl
from jax.experimental.pallas import tpu as pltpu


def _make_attention_kernel(tb, k, feature_dim):
    """Build the kernel for a given batch tile `tb` and lane-pack factor `k`."""

    def kernel(x_ref, w_ref, b_ref, o_ref):
        # x_ref: (TB, S, F) VMEM | w_ref: (1, F) VMEM f32 | b_ref: (1, 1) SMEM
        # o_ref: (TB, F) VMEM, or (TB//k, k*F) when lane packing is enabled.
        #
        # Single upcast of x to f32, reused for both the matvec and the
        # weighted sum (PyTorch computes everything in f32; for f32 inputs this
        # is a no-op, for bf16 inputs it is one conversion instead of two).
        xf = x_ref[...].astype(jnp.float32)                        # (TB, S, F)
        w = w_ref[...].reshape(1, 1, feature_dim)                  # (1, 1, F), hoisted
        b = b_ref[0, 0]

        # eij = mm(x.view(-1, F), weight).view(-1, S): per-row dot product via
        # VPU multiply + last-axis (lane) reduce.
        eij = jnp.tanh(jnp.sum(xf * w, axis=-1) + b)               # (TB, S) f32

        a = jnp.exp(eij)                                           # bounded in [e^-1, e]
        denom = jnp.sum(a, axis=-1, keepdims=True)                 # (TB, 1)
        # NB: PyTorch adds 1e-10 AFTER the normalization; exact division here.
        a = a / denom + 1e-10

        # Weighted sum over the step axis, fully in f32 (parity with PyTorch).
        o = jnp.sum(xf * a[:, :, None], axis=1)                    # (TB, F) f32

        if k > 1:
            # Lane-dense store: fold k consecutive batch rows into one 128-wide
            # lane row (row-major reshape == concatenation of the k rows).
            o = o.reshape(tb // k, k * feature_dim)
        o_ref[...] = o.astype(o_ref.dtype)

    return kernel


def _vmem_capacity_bytes(default=128 * 1024 * 1024):
    """Trace-time VMEM capacity query (falls back safely off-TPU / interpret)."""
    try:
        info = pltpu.get_tpu_info()
        cap = int(getattr(info, "vmem_capacity_bytes", default))
        return cap if cap > 0 else default
    except Exception:
        return default


def _choose_batch_tile(B, S, F, itemsize, target_bytes, multiple):
    """Largest batch tile whose x-block stays near `target_bytes`
    (Pallas double-buffers it), aligned to `multiple` rows."""
    row_bytes = max(S * F * itemsize, 1)
    tb = max(1, target_bytes // row_bytes)
    if tb >= B:
        return B                           # full-batch block (full-dim block is always legal)
    tb = (tb // multiple) * multiple       # sublane (and lane-pack) alignment
    if tb == 0:
        # TODO(synk): add an S-tiling fallback (second "arbitrary" grid axis with
        # VMEM accumulators) for shapes where even a single batch row's (1, S, F)
        # block exceeds the VMEM budget; not needed for these shapes.
        return min(B, multiple)
    return tb


def attention_forward(x, weight, bias):
    """x: (B, S, F), weight: (F, 1), bias: scalar / (1,). Returns (B, F)."""
    B, S, F = x.shape
    assert weight.shape == (F, 1)

    w_row = weight.reshape(1, F).astype(jnp.float32)           # lane-dense weight row
    b = jnp.asarray(bias, dtype=jnp.float32).reshape(1, 1)     # SMEM scalar

    # Generation-aware sizing: ~16 MiB x tiles / 96 MiB limit on v5e/v6e
    # (128 MiB VMEM), ~8 MiB tiles / 48 MiB limit on v7x (64 MiB VMEM).
    vmem_cap = _vmem_capacity_bytes()
    target_bytes = max(min(vmem_cap // 8, 16 * 1024 * 1024), 1 << 20)
    vmem_limit = int(vmem_cap * 3 // 4)

    # Lane-dense output packing factor (only when it applies cleanly).
    k = 1
    if F < 128 and 128 % F == 0 and B % (128 // F) == 0:
        k = 128 // F

    itemsize = jnp.dtype(x.dtype).itemsize
    multiple = 8 * k                       # keeps TB//k sublane-aligned when packing
    TB = _choose_batch_tile(B, S, F, itemsize, target_bytes, multiple)
    if k > 1 and TB % k != 0:
        k = 1                              # fall back to the unpacked store path
    grid = (pl.cdiv(B, TB),)

    if k > 1:
        out_shape = jax.ShapeDtypeStruct((B // k, k * F), x.dtype)
        out_spec = pl.BlockSpec((TB // k, k * F), lambda i: (i, 0))
    else:
        out_shape = jax.ShapeDtypeStruct((B, F), x.dtype)
        out_spec = pl.BlockSpec((TB, F), lambda i: (i, 0))

    out = pl.pallas_call(
        _make_attention_kernel(TB, k, F),
        out_shape=out_shape,
        grid_spec=pltpu.PrefetchScalarGridSpec(
            num_scalar_prefetch=0,
            grid=grid,
            in_specs=[
                pl.BlockSpec((TB, S, F), lambda i: (i, 0, 0)),             # x: batch-tiled stream
                pl.BlockSpec((1, F), lambda i: (0, 0)),                    # weight row: replicated
                pl.BlockSpec(memory_space=pltpu.MemorySpace.SMEM),         # bias: scalar path
            ],
            out_specs=out_spec,
        ),
        compiler_params=pltpu.CompilerParams(
            # "parallel" shards batch tiles across TCs on megacore parts; use
            # pltpu.CORE_PARALLEL here only if a v7x profile shows one TC idle.
            dimension_semantics=("parallel",),
            vmem_limit_bytes=vmem_limit,
        ),
    )(x, w_row, b)

    if k > 1:
        out = out.reshape(B, F)            # free row-major view back to (B, F)
    return out


def attention_reference(x, weight, bias):
    B, S, F = x.shape
    eij = (x.reshape(-1, F) @ weight).reshape(B, S) + jnp.asarray(bias).reshape(())
    eij = jnp.tanh(eij)
    a = jnp.exp(eij)
    a = a / jnp.sum(a, axis=1, keepdims=True) + 1e-10
    return jnp.sum(x * a[:, :, None], axis=1)


if __name__ == "__main__":
    # Shapes consistent with the module: batch=2, step_dim=8, feature_dim=32
    batch, step_dim, feature_dim = 2, 8, 32

    key = jax.random.PRNGKey(0)
    kx, kw, kx2 = jax.random.split(key, 3)

    x = jax.random.normal(kx, (batch, step_dim, feature_dim), dtype=jnp.float32)

    # Deterministic xavier_uniform_-style init for weight (feature_dim, 1):
    bound = (6.0 / (feature_dim + 1)) ** 0.5
    weight = jax.random.uniform(
        kw, (feature_dim, 1), dtype=jnp.float32, minval=-bound, maxval=bound
    )
    bias = jnp.zeros((1,), dtype=jnp.float32)   # nn.Parameter(torch.zeros(1))

    # TODO(synk): optional `mask` argument of the PyTorch forward is not implemented (mask=None path only).
    out = attention_forward(x, weight, bias)
    out = jax.block_until_ready(out)
    ref = attention_reference(x, weight, bias)
    assert out.shape == (batch, feature_dim)
    assert jnp.allclose(out, ref, atol=1e-5, rtol=1e-5), "mismatch vs reference (unpacked path)"

    # Second shape exercises the lane-dense packed-output path (batch % (128//F) == 0).
    batch2 = 16
    x2 = jax.random.normal(kx2, (batch2, step_dim, feature_dim), dtype=jnp.float32)
    out2 = jax.block_until_ready(attention_forward(x2, weight, bias))
    ref2 = attention_reference(x2, weight, bias)
    assert out2.shape == (batch2, feature_dim)
    assert jnp.allclose(out2, ref2, atol=1e-5, rtol=1e-5), "mismatch vs reference (packed path)"

    print("KERNEL_OK")
</pallas_src>

<mosaic_0001>
module attributes {stable_mosaic.version = 11 : i64} {
  func.func @kernel(%arg0: i32, %arg1: memref<2x8x32xf32, #tpu.memory_space<vmem>>, %arg2: memref<1x32xf32, #tpu.memory_space<vmem>>, %arg3: memref<1x1xf32, #tpu.memory_space<smem>>, %arg4: memref<2x32xf32, #tpu.memory_space<vmem>>) attributes {dimension_semantics = [#tpu.dimension_semantics<parallel>], iteration_bounds = array<i64: 1>, scalar_prefetch = 0 : i64, scratch_operands = 0 : i64, tpu.core_type = #tpu.core_type<tc>, window_params = [{transform_indices = @transform_0, window_bounds = array<i64: 2, 8, 32>}, {pipeline_mode = #tpu.pipeline_mode<synchronous>, transform_indices = @transform_1, window_bounds = array<i64: 1, 32>}, {transform_indices = @transform_2, window_bounds = array<i64: 1, 1>}, {transform_indices = @transform_3, window_bounds = array<i64: 2, 32>}]} {
    %c0 = arith.constant 0 : index
    %c0_0 = arith.constant 0 : index
    %c0_1 = arith.constant 0 : index
    %0 = vector.load %arg1[%c0, %c0_0, %c0_1] : memref<2x8x32xf32, #tpu.memory_space<vmem>>, vector<2x8x32xf32>
    %c0_2 = arith.constant 0 : index
    %c0_3 = arith.constant 0 : index
    %1 = vector.load %arg2[%c0_2, %c0_3] : memref<1x32xf32, #tpu.memory_space<vmem>>, vector<1x32xf32>
    %2 = vector.shape_cast %1 : vector<1x32xf32> to vector<1x1x32xf32>
    %c0_4 = arith.constant 0 : index
    %c0_5 = arith.constant 0 : index
    %3 = memref.load %arg3[%c0_4, %c0_5] : memref<1x1xf32, #tpu.memory_space<smem>>
    %4 = vector.broadcast %2 : vector<1x1x32xf32> to vector<2x8x32xf32>
    %5 = arith.mulf %0, %4 : vector<2x8x32xf32>
    %cst = arith.constant dense<0.000000e+00> : vector<2x8xf32>
    %6 = vector.multi_reduction <add>, %5, %cst [2] : vector<2x8x32xf32> to vector<2x8xf32>
    %7 = vector.broadcast %3 : f32 to vector<2x8xf32>
    %8 = arith.addf %6, %7 : vector<2x8xf32>
    %9 = math.tanh %8 : vector<2x8xf32>
    %10 = math.exp %9 : vector<2x8xf32>
    %cst_6 = arith.constant dense<0.000000e+00> : vector<2xf32>
    %11 = vector.multi_reduction <add>, %10, %cst_6 [1] : vector<2x8xf32> to vector<2xf32>
    %12 = vector.shape_cast %11 : vector<2xf32> to vector<2x1xf32>
    %13 = vector.broadcast %12 : vector<2x1xf32> to vector<2x8xf32>
    %14 = arith.divf %10, %13 : vector<2x8xf32>
    %cst_7 = arith.constant 1.000000e-10 : f32
    %15 = vector.broadcast %cst_7 : f32 to vector<2x8xf32>
    %16 = arith.addf %14, %15 : vector<2x8xf32>
    %17 = vector.shape_cast %16 : vector<2x8xf32> to vector<2x8x1xf32>
    %18 = vector.broadcast %17 : vector<2x8x1xf32> to vector<2x8x32xf32>
    %19 = arith.mulf %0, %18 : vector<2x8x32xf32>
    %cst_8 = arith.constant dense<0.000000e+00> : vector<2x32xf32>
    %20 = vector.multi_reduction <add>, %19, %cst_8 [1] : vector<2x8x32xf32> to vector<2x32xf32>
    %c0_9 = arith.constant 0 : index
    %c0_10 = arith.constant 0 : index
    %21 = vector.load %arg4[%c0_9, %c0_10] : memref<2x32xf32, #tpu.memory_space<vmem>>, vector<2x32xf32>
    tpu.vector_store %arg4[%c0_9, %c0_10], %20 {strides = array<i32>} : memref<2x32xf32, #tpu.memory_space<vmem>>, vector<2x32xf32>,
    return
  }
  func.func @transform_0(%arg0: i32) -> (i32, i32, i32) {
    %c0_i32 = arith.constant 0 : i32
    %c0_i32_0 = arith.constant 0 : i32
    %c0_i32_1 = arith.constant 0 : i32
    return %arg0, %c0_i32, %c0_i32_0 : i32, i32, i32
  }
  func.func @transform_1(%arg0: i32) -> (i32, i32) {
    %c0_i32 = arith.constant 0 : i32
    %c0_i32_0 = arith.constant 0 : i32
    %c0_i32_1 = arith.constant 0 : i32
    return %c0_i32, %c0_i32_0 : i32, i32
  }
  func.func @transform_2(%arg0: i32) -> (i32, i32) {
    %c0_i32 = arith.constant 0 : i32
    %c0_i32_0 = arith.constant 0 : i32
    %c0_i32_1 = arith.constant 0 : i32
    return %c0_i32, %c0_i32_0 : i32, i32
  }
  func.func @transform_3(%arg0: i32) -> (i32, i32) {
    %c0_i32 = arith.constant 0 : i32
    %c0_i32_0 = arith.constant 0 : i32
    return %arg0, %c0_i32 : i32, i32
  }
}

</mosaic_0001>

<llo_original>
// kernel: tpu_custom_call.1
$region0: #{tpu_custom_call.1}
  #allocation0 [shape = 'u32[]', space=smem, size = 0x4, offset = 0x4, fixed_abs, tag = 'smem constant byte address 0x4 - core index']
  #allocation1 [shape = 'u32[144,128]{1,0:T(1,128)}', space=vmem, size = 0x12000, scoped, tag = 'internal scratch']
  #allocation2 [shape = 'f32[1,1]{1,0:T(1,128)S(6)}', space=smem, size = 0x200, scoped, tag = 'scoped memory for tpu_custom_call.1']
  %s0 = inlined_call_operand.hbm [shape: f32[2,8,32], index: 0, kind: input, shape index: {}]
  %s1 = inlined_call_operand.vmem [shape: f32[1,32], index: 1, kind: input, shape index: {}]
  %s2 = inlined_call_operand.<no memory space> [shape: f32[1,1], index: 2, kind: input, shape index: {}]
  %s3 = inlined_call_operand.hbm [shape: f32[2,32], index: 3, kind: output, shape index: {}]
  %s4 = sld [smem:[#allocation0]]
  $region26: #{tpu_custom_call.1} parent=0
    _
  %s6 = ssub.s32 1, %s4
  %s7 = scalar_select 0, %s6, %s4
  %8 = sst [smem:[#allocation2]] %s2
  $region1: #{tpu_custom_call.1} parent=0
    #allocation3 [shape = 'u8[8192]{0}', space=vmem, size = 0x2000, scoped, tag = 'input window, operand 0, single buffered']
    #allocation4 [shape = 's32[1]{0}', space=sflag, size = 0x4, scoped, tag = 'scoped memory for tpu_custom_call.1']
    #allocation5 [shape = 's32[1]{0}', space=sflag, size = 0x4, scoped, tag = 'scoped memory for tpu_custom_call.1']
    #allocation6 [shape = 'u8[1024]{0}', space=vmem, size = 0x400, scoped, tag = 'output window, operand 0, single buffered']
    %9 = vsyncpa [#allocation4], 0
    %10 = vsyncpa [#allocation5], 0
    // Predicated region
    $region2: #{tpu_custom_call.1} parent=1 // pred_check
      _
    $region3: #{tpu_custom_call.1} parent=1 // pred_check_branch
      %12 = sbr.rel (0) target = $region5
    $region4: #{tpu_custom_call.1} parent=1 // pred_region
      %s14 = ssub.s32 256, 256
      %15 = vsyncadd [#allocation4], %s14
      %s16 = sshll.u32 [#allocation3], 4
      %s17 = int_to_ptr.vmem [resolvable:$true] %s16
      %22 = dma.hbm_to_vmem [thread:$0]  %s0, 256, %s17, [#allocation4], 128, 128, 8
    $region5: #{tpu_custom_call.1} parent=1 // pred_fallthru
      _
    // Predicated region
    $region6: #{tpu_custom_call.1} parent=1 // pred_check
      _
    $region7: #{tpu_custom_call.1} parent=1 // pred_check_branch
      %24 = sbr.rel (0) target = $region9
    $region8: #{tpu_custom_call.1} parent=1 // pred_region
      _
    $region9: #{tpu_custom_call.1} parent=1 // pred_fallthru
      _
    // Predicated region
    $region10: #{tpu_custom_call.1} parent=1 // pred_check
      _
    $region11: #{tpu_custom_call.1} parent=1 // pred_check_branch
      %26 = sbr.rel (0) target = $region13
    $region12: #{tpu_custom_call.1} parent=1 // pred_region
      _
    $region13: #{tpu_custom_call.1} parent=1 // pred_fallthru
      _
    // Predicated region
    $region14: #{tpu_custom_call.1} parent=1 // pred_check
      _
    $region15: #{tpu_custom_call.1} parent=1 // pred_check_branch
      %28 = sbr.rel (0) target = $region17
    $region16: #{tpu_custom_call.1} parent=1 // pred_region
      %29 = dma.done [#allocation4], 256
    $region17: #{tpu_custom_call.1} parent=1 // pred_fallthru
      _
    %v30 = vld [vmem:[#allocation3] sm:$0xff]
    %v31 = vld [vmem:[#allocation3 + $0x8] sm:$0xff]
    %v32 = vld [vmem:[%s1] sm:$0x1]
    %s33 = sld [smem:[#allocation2]]
    %v35 = vlaneseq
    %v36 = vshrl.u32 %v35, 7
    %v37 = vsub.s32 0, %v36
    %v38 = vrot.slane %v32, %v37
    %v40 = vmul.f32 %v30, %v38
    %v41 = vmul.f32 %v31, %v38
    %vm42 = vcmask 261120
    %v43 = vsel %vm42, %v40, 0.0
    %44 = vadd.xlane.f32.xlu0 %v43
    %v45 = vpop.xlane.xlu0 %44
    %v46 = vsel %vm42, %v41, 0.0
    %47 = vadd.xlane.f32.xlu0 %v46
    %v48 = vpop.xlane.xlu0 %47
    %v49 = vstv %s33
    %v50 = vadd.f32 %v45, %v49
    %v51 = vadd.f32 %v48, %v49
    %v52 = vtanh.pop %v50
    %v53 = vtanh.pop %v51
    %v54 = vmul.f32 %v52, 1.442695
    %v55 = vpow.pop %v54
    %v56 = vmul.f32 %v53, 1.442695
    %v57 = vpow.pop %v56
    %v60 = vlaneseq
    %v61 = vand.u32 %v60, 127
    %v62 = vlaneseq
    %v63 = vshrl.u32 %v62, 7
    %v64 = vsub.s32 %v61, %v63
    %v65 = vrot.slane %v55, %v64
    %v66 = vlaneseq
    %v67 = vshrl.u32 %v66, 7
    %v68 = vsub.s32 %v61, %v67
    %v69 = vrot.slane %v57, %v68
    %vm70 = vcmask 1041409
    %v71 = vsel %vm70, %v69, %v65
    %vm73 = vcmask 58368
    %v74 = vsel %vm73, %v71, 0.0
    %75 = vadd.xlane.f32.xlu0 %v74
    %v76 = vpop.xlane.xlu0 %75
    %v78 = vlaneseq
    %v79 = vshrl.u32 %v78, 7
    %v80 = vsub.s32 0, %v79
    %v81 = vrot.slane %v76, %v80
    %v82 = vlaneseq
    %v83 = vshrl.u32 %v82, 7
    %v84 = vsub.s32 1, %v83
    %v85 = vrot.slane %v76, %v84
    %v88 = vrcp.pop %v81
    %v89 = vmul.f32 %v55, %v88
    %v90 = vrcp.pop %v85
    %v91 = vmul.f32 %v57, %v90
    %v92 = vadd.f32 %v89, 1e-10
    %v93 = vadd.f32 %v91, 1e-10
    %95 = vset.pattern.permute.xlu0 0
    %96 = vperm.xlu0 %95, %v92
    %v97 = vpop.permute.xlu0 %96
    %100 = vset.pattern.permute.xlu0 0
    %101 = vperm.xlu0 %100, %v93
    %v102 = vpop.permute.xlu0 %101
    %v104 = vmul.f32 %v30, %v97
    %v105 = vmul.f32 %v31, %v102
    %v106 = vsel %vm42, %v104, 0.0
    %v107 = vrot.slane %v106, 4
    %v108 = vadd.f32 %v106, %v107
    %v109 = vrot.slane %v108, 2
    %v110 = vadd.f32 %v108, %v109
    %v111 = vrot.slane %v110, 1
    %v112 = vadd.f32 %v110, %v111
    %v113 = vsel %vm42, %v105, 0.0
    %v114 = vrot.slane %v113, 4
    %v115 = vadd.f32 %v113, %v114
    %v116 = vrot.slane %v115, 2
    %v117 = vadd.f32 %v115, %v116
    %v118 = vrot.slane %v117, 1
    %v119 = vadd.f32 %v117, %v118
    %v122 = vsel %vm70, %v119, %v112
    %vm124 = vcmask 254976
    %125 = vst.msk [vmem:[#allocation6] sm:$0x3] %vm124, %v122
    // Predicated region
    $region18: #{tpu_custom_call.1} parent=1 // pred_check
      _
    $region19: #{tpu_custom_call.1} parent=1 // pred_check_branch
      %127 = sbr.rel (0) target = $region21
    $region20: #{tpu_custom_call.1} parent=1 // pred_region
      %s129 = ssub.s32 32, 32
      %130 = vsyncadd [#allocation5], %s129
      %s132 = sshll.u32 [#allocation6], 4
      %s133 = int_to_ptr.vmem [resolvable:$true] %s132
      %135 = dma.vmem_to_hbm [thread:$0]  %s133, 32, %s3, [#allocation5]
    $region21: #{tpu_custom_call.1} parent=1 // pred_fallthru
      _
    // Predicated region
    $region22: #{tpu_custom_call.1} parent=1 // pred_check
      _
    $region23: #{tpu_custom_call.1} parent=1 // pred_check_branch
      %137 = sbr.rel (0) target = $region25
    $region24: #{tpu_custom_call.1} parent=1 // pred_region
      %138 = dma.done [#allocation5], 32
    $region25: #{tpu_custom_call.1} parent=1 // pred_fallthru
      _
    %139 = vsyncpa [#allocation4], 1
    %140 = vsyncpa [#allocation5], 1

</llo_original>
